<compile_context>
chip_gen: v7x
topology: tpu7x:2x2x1
jax: 0.10.0
libtpu: 0.0.40
codegen_flags: <defaults>
</compile_context>

<pallas_src>
import functools
import math

import jax
import jax.numpy as jnp
from jax import lax
from jax.experimental import pallas as pl
from jax.experimental.pallas import tpu as pltpu

LN_EPS = 1e-5
LANES = 128


def _round_up(a, b):
    return ((a + b - 1) // b) * b


def _gelu_tanh(x):
    # GELU, tanh approximation (== torch.nn.GELU(approximate='tanh')).
    c = math.sqrt(2.0 / math.pi)
    return 0.5 * x * (1.0 + jnp.tanh(c * (x + 0.044715 * x * x * x)))


def _resnet_block_kernel(*refs, packed):
    # packed=True  : x_ref (rtp, 128) where each lane-row holds `fold` logical rows of
    #                width D; seg_ref (128, 128) segment-mean matrix; weights are the
    #                block-diagonal (kron) expansions; everything stays lane-dense.
    # packed=False : x_ref (rt, D) plain row tile (D >= 128 already lane-dense).
    if packed:
        (x_ref, seg_ref, g_ref, b_ref, w1_ref, b1_ref, w2_ref, b2_ref, o_ref) = refs
    else:
        (x_ref, g_ref, b_ref, w1_ref, b1_ref, w2_ref, b2_ref, o_ref) = refs
        seg_ref = None

    x = x_ref[...].astype(jnp.float32)

    # --- LayerNorm statistics (f32) -------------------------------------------------
    if packed:
        # (x @ seg)[i, l] = mean of x[i, lanes-in-group(l)] -> per-logical-row mean,
        # already broadcast back to every lane of its group.  Same for the variance.
        seg = seg_ref[...]
        mean = jnp.dot(x, seg, preferred_element_type=jnp.float32)
        cent = x - mean
        var = jnp.dot(cent * cent, seg, preferred_element_type=jnp.float32)
    else:
        mean = jnp.mean(x, axis=-1, keepdims=True)
        cent = x - mean
        var = jnp.mean(cent * cent, axis=-1, keepdims=True)

    xn = cent * lax.rsqrt(var + LN_EPS)
    xn = xn * g_ref[...].astype(jnp.float32) + b_ref[...].astype(jnp.float32)

    # --- Mlp: fc1 -> GELU -> fc2 (MXU in weight dtype, f32 accumulation) -------------
    w1 = w1_ref[...]
    w2 = w2_ref[...]
    h = jnp.dot(xn.astype(w1.dtype), w1, preferred_element_type=jnp.float32)
    h = h + b1_ref[...].astype(jnp.float32)
    # NOTE: on v6e/v7x a bf16 GELU (cast h once) halves VPU/EUP work; kept f32 here so
    # the f32-weight test matches the reference bit-for-bit within 1e-4.
    h = _gelu_tanh(h)
    y = jnp.dot(h.astype(w2.dtype), w2, preferred_element_type=jnp.float32)
    y = y + b2_ref[...].astype(jnp.float32)

    # --- Residual add with the original (pre-norm) x, single downcast ----------------
    o_ref[...] = (x + y).astype(o_ref.dtype)


def _vmem_budget_bytes(rtp, dp, hp, x_itemsize, w_itemsize, packed):
    # x/out tiles double-buffered; grid-invariant params counted once (constant
    # index_map -> resident); f32 intermediates for one tile; generous slack.
    xio = 2 * 2 * rtp * dp * x_itemsize
    params = 2 * dp * hp * w_itemsize + (2 * dp + hp + dp) * 4
    if packed:
        params += dp * dp * 4  # segment-mean matrix
    inter = rtp * hp * 4 + 4 * rtp * dp * 4
    return xio + params + inter + (4 << 20)


def resnet_block(x, gamma, beta, w1, b1, w2, b2, *, row_tile=1024):
    """x: [B, S, D]; w1: [D, H]; w2: [H, D]. Returns [B, S, D]."""
    B, S, D = x.shape
    H = w1.shape[1]
    rows = B * S
    out_dtype = x.dtype

    # --- lane-dense folding factor ----------------------------------------------------
    fold = LANES // D if (D < LANES and LANES % D == 0) else 1
    if fold > 1 and rows % fold != 0:
        fold = 1  # fall back to the plain (masked-store) path for awkward row counts

    Dp = fold * D          # packed feature width (lane axis), 128 when folding
    Hp = fold * H          # packed hidden width
    rows_p = rows // fold  # packed row count
    packed = fold > 1

    x2 = x.reshape(rows_p, Dp)  # free: same contiguous row-major bytes

    if packed:
        eye = jnp.eye(fold, dtype=w1.dtype)
        w1p = jnp.kron(eye, w1)                      # (Dp, Hp) block-diagonal
        w2p = jnp.kron(eye, w2)                      # (Hp, Dp) block-diagonal
        gammap = jnp.tile(gamma, fold).reshape(1, Dp)
        betap = jnp.tile(beta, fold).reshape(1, Dp)
        b1p = jnp.tile(b1, fold).reshape(1, Hp)
        b2p = jnp.tile(b2, fold).reshape(1, Dp)
        grp = jnp.arange(Dp) // D
        seg = (grp[:, None] == grp[None, :]).astype(jnp.float32) / D  # (Dp, Dp)
    else:
        w1p, w2p = w1, w2
        gammap, betap = gamma.reshape(1, D), beta.reshape(1, D)
        b1p, b2p = b1.reshape(1, H), b2.reshape(1, D)
        seg = None

    # --- row tiling: big tiles, logical row tile a multiple of 32 ----------------------
    sub = max(8, 32 // fold)
    if rows_p <= sub:
        rtp = rows_p  # single block equal to the full extent (no partial block)
    else:
        rtp = min(max(sub, _round_up(row_tile, 32) // fold), _round_up(rows_p, sub))
        rtp = max(sub, (rtp // sub) * sub)
    n_tiles = pl.cdiv(rows_p, rtp)

    # --- generation-aware VMEM limit ---------------------------------------------------
    try:
        phys_vmem = int(pltpu.get_tpu_info().vmem_capacity_bytes)
    except Exception:
        phys_vmem = 64 * 2**20  # most conservative (v7x per-TensorCore VMEM)
    cap = int(phys_vmem * 0.8)  # headroom for compiler internal scratch
    need = _vmem_budget_bytes(rtp, Dp, Hp, x2.dtype.itemsize, w1.dtype.itemsize, packed)
    vmem_limit = int(min(cap, max(need, 32 * 2**20)))

    # --- advisory cost for XLA's scheduler ---------------------------------------------
    flops = 4 * rows_p * Dp * Hp + (4 * rows_p * Dp * Dp if packed else 0)
    bytes_accessed = (
        2 * rows_p * Dp * x2.dtype.itemsize
        + 2 * Dp * Hp * w1.dtype.itemsize
        + (2 * Dp + Hp + Dp) * 4
        + (Dp * Dp * 4 if packed else 0)
    )
    cost = pl.CostEstimate(
        flops=flops,
        transcendentals=rows_p * Hp,  # tanh in GELU
        bytes_accessed=bytes_accessed,
    )

    x_spec = pl.BlockSpec((rtp, Dp), lambda i: (i, 0))
    const = lambda i: (0, 0)  # grid-invariant blocks stay resident across steps
    in_specs = [x_spec]
    operands = [x2]
    if packed:
        in_specs.append(pl.BlockSpec((Dp, Dp), const))
        operands.append(seg)
    in_specs += [
        pl.BlockSpec((1, Dp), const),   # ln gamma
        pl.BlockSpec((1, Dp), const),   # ln beta
        pl.BlockSpec((Dp, Hp), const),  # fc1 weight
        pl.BlockSpec((1, Hp), const),   # fc1 bias
        pl.BlockSpec((Hp, Dp), const),  # fc2 weight
        pl.BlockSpec((1, Dp), const),   # fc2 bias
    ]
    operands += [gammap, betap, w1p, b1p, w2p, b2p]

    out2 = pl.pallas_call(
        functools.partial(_resnet_block_kernel, packed=packed),
        out_shape=jax.ShapeDtypeStruct((rows_p, Dp), out_dtype),
        grid_spec=pltpu.PrefetchScalarGridSpec(
            num_scalar_prefetch=0,
            grid=(n_tiles,),
            in_specs=in_specs,
            out_specs=pl.BlockSpec((rtp, Dp), lambda i: (i, 0)),
        ),
        compiler_params=pltpu.CompilerParams(
            dimension_semantics=("parallel",),
            vmem_limit_bytes=vmem_limit,
        ),
        cost_estimate=cost,
    )(*operands)

    return out2.reshape(B, S, D)


def reference(x, gamma, beta, w1, b1, w2, b2):
    # Pure-JAX reference of the PyTorch forward (dropout=Identity, tanh GELU).
    xf = x.astype(jnp.float32)
    mean = jnp.mean(xf, axis=-1, keepdims=True)
    var = jnp.mean((xf - mean) ** 2, axis=-1, keepdims=True)
    xn = (xf - mean) * lax.rsqrt(var + LN_EPS) * gamma + beta
    h = jax.nn.gelu(xn @ w1 + b1, approximate=True)
    y = h @ w2 + b2
    return (xf + y).astype(x.dtype)


if __name__ == "__main__":
    # Small shapes consistent with the module: dim=32, hidden=4*dim=128.
    B, S, D = 2, 8, 32
    H = 4 * D

    key = jax.random.PRNGKey(0)
    kx, kw1, kb1, kw2, kb2 = jax.random.split(key, 5)

    x = jax.random.normal(kx, (B, S, D), dtype=jnp.float32)

    # Deterministic parameter init (nn.Linear-style uniform fan_in bounds).
    gamma = jnp.ones((D,), jnp.float32)
    beta = jnp.zeros((D,), jnp.float32)
    bound1 = 1.0 / math.sqrt(D)
    w1 = jax.random.uniform(kw1, (D, H), jnp.float32, -bound1, bound1)
    b1 = jax.random.uniform(kb1, (H,), jnp.float32, -bound1, bound1)
    bound2 = 1.0 / math.sqrt(H)
    w2 = jax.random.uniform(kw2, (H, D), jnp.float32, -bound2, bound2)
    b2 = jax.random.uniform(kb2, (D,), jnp.float32, -bound2, bound2)

    out = resnet_block(x, gamma, beta, w1, b1, w2, b2)
    out = jax.block_until_ready(out)

    ref = reference(x, gamma, beta, w1, b1, w2, b2)
    assert out.shape == (B, S, D)
    assert jnp.allclose(out, ref, atol=1e-4, rtol=1e-4), "mismatch vs reference"

    print("KERNEL_OK")
</pallas_src>

<mosaic_0001>
module attributes {stable_mosaic.version = 11 : i64} {
  func.func @_resnet_block_kernel(%arg0: i32, %arg1: memref<4x128xf32, #tpu.memory_space<vmem>>, %arg2: memref<128x128xf32, #tpu.memory_space<vmem>>, %arg3: memref<1x128xf32, #tpu.memory_space<vmem>>, %arg4: memref<1x128xf32, #tpu.memory_space<vmem>>, %arg5: memref<128x512xf32, #tpu.memory_space<vmem>>, %arg6: memref<1x512xf32, #tpu.memory_space<vmem>>, %arg7: memref<512x128xf32, #tpu.memory_space<vmem>>, %arg8: memref<1x128xf32, #tpu.memory_space<vmem>>, %arg9: memref<4x128xf32, #tpu.memory_space<vmem>>) attributes {dimension_semantics = [#tpu.dimension_semantics<parallel>], iteration_bounds = array<i64: 1>, scalar_prefetch = 0 : i64, scratch_operands = 0 : i64, tpu.core_type = #tpu.core_type<tc>, window_params = [{transform_indices = @transform_0, window_bounds = array<i64: 4, 128>}, {pipeline_mode = #tpu.pipeline_mode<synchronous>, transform_indices = @transform_1, window_bounds = array<i64: 128, 128>}, {pipeline_mode = #tpu.pipeline_mode<synchronous>, transform_indices = @transform_2, window_bounds = array<i64: 1, 128>}, {pipeline_mode = #tpu.pipeline_mode<synchronous>, transform_indices = @transform_3, window_bounds = array<i64: 1, 128>}, {pipeline_mode = #tpu.pipeline_mode<synchronous>, transform_indices = @transform_4, window_bounds = array<i64: 128, 512>}, {pipeline_mode = #tpu.pipeline_mode<synchronous>, transform_indices = @transform_5, window_bounds = array<i64: 1, 512>}, {pipeline_mode = #tpu.pipeline_mode<synchronous>, transform_indices = @transform_6, window_bounds = array<i64: 512, 128>}, {pipeline_mode = #tpu.pipeline_mode<synchronous>, transform_indices = @transform_7, window_bounds = array<i64: 1, 128>}, {transform_indices = @transform_8, window_bounds = array<i64: 4, 128>}]} {
    %c0 = arith.constant 0 : index
    %c0_0 = arith.constant 0 : index
    %0 = vector.load %arg1[%c0, %c0_0] : memref<4x128xf32, #tpu.memory_space<vmem>>, vector<4x128xf32>
    %c0_1 = arith.constant 0 : index
    %c0_2 = arith.constant 0 : index
    %1 = vector.load %arg2[%c0_1, %c0_2] : memref<128x128xf32, #tpu.memory_space<vmem>>, vector<128x128xf32>
    %cst = arith.constant dense<0.000000e+00> : vector<4x128xf32>
    %2 = tpu.matmul %0, %1, %cst {dimension_numbers = #tpu.dot_dimension_numbers<[1], [0], [0], [1], [0, 0, 1, 1], [], []>} : vector<4x128xf32>, vector<128x128xf32>, vector<4x128xf32> -> vector<4x128xf32>
    %3 = arith.subf %0, %2 : vector<4x128xf32>
    %4 = arith.mulf %3, %3 : vector<4x128xf32>
    %cst_3 = arith.constant dense<0.000000e+00> : vector<4x128xf32>
    %5 = tpu.matmul %4, %1, %cst_3 {dimension_numbers = #tpu.dot_dimension_numbers<[1], [0], [0], [1], [0, 0, 1, 1], [], []>} : vector<4x128xf32>, vector<128x128xf32>, vector<4x128xf32> -> vector<4x128xf32>
    %cst_4 = arith.constant 9.99999974E-6 : f32
    %6 = vector.broadcast %cst_4 : f32 to vector<4x128xf32>
    %7 = arith.addf %5, %6 : vector<4x128xf32>
    %8 = math.rsqrt %7 : vector<4x128xf32>
    %9 = arith.mulf %3, %8 : vector<4x128xf32>
    %c0_5 = arith.constant 0 : index
    %c0_6 = arith.constant 0 : index
    %10 = vector.load %arg3[%c0_5, %c0_6] : memref<1x128xf32, #tpu.memory_space<vmem>>, vector<1x128xf32>
    %11 = vector.broadcast %10 : vector<1x128xf32> to vector<4x128xf32>
    %12 = arith.mulf %9, %11 : vector<4x128xf32>
    %c0_7 = arith.constant 0 : index
    %c0_8 = arith.constant 0 : index
    %13 = vector.load %arg4[%c0_7, %c0_8] : memref<1x128xf32, #tpu.memory_space<vmem>>, vector<1x128xf32>
    %14 = vector.broadcast %13 : vector<1x128xf32> to vector<4x128xf32>
    %15 = arith.addf %12, %14 : vector<4x128xf32>
    %c0_9 = arith.constant 0 : index
    %c0_10 = arith.constant 0 : index
    %16 = vector.load %arg5[%c0_9, %c0_10] : memref<128x512xf32, #tpu.memory_space<vmem>>, vector<128x512xf32>
    %c0_11 = arith.constant 0 : index
    %c0_12 = arith.constant 0 : index
    %17 = vector.load %arg7[%c0_11, %c0_12] : memref<512x128xf32, #tpu.memory_space<vmem>>, vector<512x128xf32>
    %cst_13 = arith.constant dense<0.000000e+00> : vector<4x512xf32>
    %18 = tpu.matmul %15, %16, %cst_13 {dimension_numbers = #tpu.dot_dimension_numbers<[1], [0], [0], [1], [0, 0, 1, 1], [], []>} : vector<4x128xf32>, vector<128x512xf32>, vector<4x512xf32> -> vector<4x512xf32>
    %c0_14 = arith.constant 0 : index
    %c0_15 = arith.constant 0 : index
    %19 = vector.load %arg6[%c0_14, %c0_15] : memref<1x512xf32, #tpu.memory_space<vmem>>, vector<1x512xf32>
    %20 = vector.broadcast %19 : vector<1x512xf32> to vector<4x512xf32>
    %21 = arith.addf %18, %20 : vector<4x512xf32>
    %cst_16 = arith.constant 5.000000e-01 : f32
    %22 = vector.broadcast %cst_16 : f32 to vector<4x512xf32>
    %23 = arith.mulf %22, %21 : vector<4x512xf32>
    %cst_17 = arith.constant 4.471500e-02 : f32
    %24 = vector.broadcast %cst_17 : f32 to vector<4x512xf32>
    %25 = arith.mulf %24, %21 : vector<4x512xf32>
    %26 = arith.mulf %25, %21 : vector<4x512xf32>
    %27 = arith.mulf %26, %21 : vector<4x512xf32>
    %28 = arith.addf %21, %27 : vector<4x512xf32>
    %cst_18 = arith.constant 0.797884583 : f32
    %29 = vector.broadcast %cst_18 : f32 to vector<4x512xf32>
    %30 = arith.mulf %29, %28 : vector<4x512xf32>
    %31 = math.tanh %30 : vector<4x512xf32>
    %cst_19 = arith.constant 1.000000e+00 : f32
    %32 = vector.broadcast %cst_19 : f32 to vector<4x512xf32>
    %33 = arith.addf %32, %31 : vector<4x512xf32>
    %34 = arith.mulf %23, %33 : vector<4x512xf32>
    %cst_20 = arith.constant dense<0.000000e+00> : vector<4x128xf32>
    %35 = tpu.matmul %34, %17, %cst_20 {dimension_numbers = #tpu.dot_dimension_numbers<[1], [0], [0], [1], [0, 0, 1, 1], [], []>} : vector<4x512xf32>, vector<512x128xf32>, vector<4x128xf32> -> vector<4x128xf32>
    %c0_21 = arith.constant 0 : index
    %c0_22 = arith.constant 0 : index
    %36 = vector.load %arg8[%c0_21, %c0_22] : memref<1x128xf32, #tpu.memory_space<vmem>>, vector<1x128xf32>
    %37 = vector.broadcast %36 : vector<1x128xf32> to vector<4x128xf32>
    %38 = arith.addf %35, %37 : vector<4x128xf32>
    %39 = arith.addf %0, %38 : vector<4x128xf32>
    %c0_23 = arith.constant 0 : index
    %c0_24 = arith.constant 0 : index
    %40 = vector.load %arg9[%c0_23, %c0_24] : memref<4x128xf32, #tpu.memory_space<vmem>>, vector<4x128xf32>
    tpu.vector_store %arg9[%c0_23, %c0_24], %39 {strides = array<i32>} : memref<4x128xf32, #tpu.memory_space<vmem>>, vector<4x128xf32>,
    return
  }
  func.func @transform_0(%arg0: i32) -> (i32, i32) {
    %c0_i32 = arith.constant 0 : i32
    %c0_i32_0 = arith.constant 0 : i32
    return %arg0, %c0_i32 : i32, i32
  }
  func.func @transform_1(%arg0: i32) -> (i32, i32) {
    %c0_i32 = arith.constant 0 : i32
    %c0_i32_0 = arith.constant 0 : i32
    %c0_i32_1 = arith.constant 0 : i32
    return %c0_i32, %c0_i32_0 : i32, i32
  }
  func.func @transform_2(%arg0: i32) -> (i32, i32) {
    %c0_i32 = arith.constant 0 : i32
    %c0_i32_0 = arith.constant 0 : i32
    %c0_i32_1 = arith.constant 0 : i32
    return %c0_i32, %c0_i32_0 : i32, i32
  }
  func.func @transform_3(%arg0: i32) -> (i32, i32) {
    %c0_i32 = arith.constant 0 : i32
    %c0_i32_0 = arith.constant 0 : i32
    %c0_i32_1 = arith.constant 0 : i32
    return %c0_i32, %c0_i32_0 : i32, i32
  }
  func.func @transform_4(%arg0: i32) -> (i32, i32) {
    %c0_i32 = arith.constant 0 : i32
    %c0_i32_0 = arith.constant 0 : i32
    %c0_i32_1 = arith.constant 0 : i32
    return %c0_i32, %c0_i32_0 : i32, i32
  }
  func.func @transform_5(%arg0: i32) -> (i32, i32) {
    %c0_i32 = arith.constant 0 : i32
    %c0_i32_0 = arith.constant 0 : i32
    %c0_i32_1 = arith.constant 0 : i32
    return %c0_i32, %c0_i32_0 : i32, i32
  }
  func.func @transform_6(%arg0: i32) -> (i32, i32) {
    %c0_i32 = arith.constant 0 : i32
    %c0_i32_0 = arith.constant 0 : i32
    %c0_i32_1 = arith.constant 0 : i32
    return %c0_i32, %c0_i32_0 : i32, i32
  }
  func.func @transform_7(%arg0: i32) -> (i32, i32) {
    %c0_i32 = arith.constant 0 : i32
    %c0_i32_0 = arith.constant 0 : i32
    %c0_i32_1 = arith.constant 0 : i32
    return %c0_i32, %c0_i32_0 : i32, i32
  }
  func.func @transform_8(%arg0: i32) -> (i32, i32) {
    %c0_i32 = arith.constant 0 : i32
    %c0_i32_0 = arith.constant 0 : i32
    return %arg0, %c0_i32 : i32, i32
  }
}

</mosaic_0001>

<llo_original>
// kernel: tpu_custom_call.1
$region0: #{tpu_custom_call.1}
  #allocation0 [shape = 'u32[]', space=smem, size = 0x4, offset = 0x4, fixed_abs, tag = 'smem constant byte address 0x4 - core index']
  #allocation1 [shape = 'u32[144,128]{1,0:T(1,128)}', space=vmem, size = 0x12000, scoped, tag = 'internal scratch']
  %s0 = inlined_call_operand.hbm [shape: f32[4,128], index: 0, kind: input, shape index: {}]
  %s1 = inlined_call_operand.hbm [shape: f32[128,128], index: 1, kind: input, shape index: {}]
  %s2 = inlined_call_operand.vmem [shape: f32[1,128], index: 2, kind: input, shape index: {}]
  %s3 = inlined_call_operand.vmem [shape: f32[1,128], index: 3, kind: input, shape index: {}]
  %s4 = inlined_call_operand.hbm [shape: f32[128,512], index: 4, kind: input, shape index: {}]
  %s5 = inlined_call_operand.vmem [shape: f32[1,512], index: 5, kind: input, shape index: {}]
  %s6 = inlined_call_operand.hbm [shape: f32[512,128], index: 6, kind: input, shape index: {}]
  %s7 = inlined_call_operand.vmem [shape: f32[1,128], index: 7, kind: input, shape index: {}]
  %s8 = inlined_call_operand.hbm [shape: f32[4,128], index: 8, kind: output, shape index: {}]
  %s9 = sld [smem:[#allocation0]]
  $region58: #{tpu_custom_call.1} parent=0
    _
  %s11 = ssub.s32 1, %s9
  %s12 = scalar_select 0, %s11, %s9
  $region1: #{tpu_custom_call.1} parent=0
    #allocation2 [shape = 'u8[2048]{0}', space=vmem, size = 0x800, scoped, tag = 'input window, operand 0, single buffered']
    #allocation3 [shape = 's32[1]{0}', space=sflag, size = 0x4, scoped, tag = 'scoped memory for tpu_custom_call.1']
    #allocation4 [shape = 's32[1]{0}', space=sflag, size = 0x4, scoped, tag = 'scoped memory for tpu_custom_call.1']
    #allocation5 [shape = 'u8[65536]{0}', space=vmem, size = 0x10000, scoped, tag = 'input window, operand 1, single buffered']
    #allocation6 [shape = 's32[1]{0}', space=sflag, size = 0x4, scoped, tag = 'scoped memory for tpu_custom_call.1']
    #allocation7 [shape = 'u8[262144]{0}', space=vmem, size = 0x40000, scoped, tag = 'input window, operand 4, single buffered']
    #allocation8 [shape = 'u8[262144]{0}', space=vmem, size = 0x40000, scoped, tag = 'input window, operand 6, single buffered']
    #allocation9 [shape = 's32[1]{0}', space=sflag, size = 0x4, scoped, tag = 'scoped memory for tpu_custom_call.1']
    #allocation10 [shape = 'u8[2048]{0}', space=vmem, size = 0x800, scoped, tag = 'output window, operand 0, single buffered']
    %13 = vsyncpa [#allocation3], 0
    %14 = vsyncpa [#allocation6], 0
    %15 = vsyncpa [#allocation9], 0
    %16 = vsyncpa [#allocation4], 0
    // Predicated region
    $region2: #{tpu_custom_call.1} parent=1 // pred_check
      _
    $region3: #{tpu_custom_call.1} parent=1 // pred_check_branch
      %18 = sbr.rel (0) target = $region5
    $region4: #{tpu_custom_call.1} parent=1 // pred_region
      %s20 = ssub.s32 64, 64
      %21 = vsyncadd [#allocation3], %s20
      %s23 = sshll.u32 [#allocation2], 4
      %s24 = int_to_ptr.vmem [resolvable:$true] %s23
      %26 = dma.hbm_to_vmem [thread:$0]  %s0, 64, %s24, [#allocation3]
    $region5: #{tpu_custom_call.1} parent=1 // pred_fallthru
      _
    // Predicated region
    $region6: #{tpu_custom_call.1} parent=1 // pred_check
      _
    $region7: #{tpu_custom_call.1} parent=1 // pred_check_branch
      %28 = sbr.rel (0) target = $region9
    $region8: #{tpu_custom_call.1} parent=1 // pred_region
      %s30 = ssub.s32 2048, 2048
      %31 = vsyncadd [#allocation6], %s30
      %s32 = sshll.u32 [#allocation5], 4
      %s33 = int_to_ptr.vmem [resolvable:$true] %s32
      %38 = dma.hbm_to_vmem [thread:$0]  %s1, 2048, %s33, [#allocation6], 128, 128, 8
    $region9: #{tpu_custom_call.1} parent=1 // pred_fallthru
      _
    // Predicated region
    $region10: #{tpu_custom_call.1} parent=1 // pred_check
      _
    $region11: #{tpu_custom_call.1} parent=1 // pred_check_branch
      %40 = sbr.rel (0) target = $region13
    $region12: #{tpu_custom_call.1} parent=1 // pred_region
      _
    $region13: #{tpu_custom_call.1} parent=1 // pred_fallthru
      _
    // Predicated region
    $region14: #{tpu_custom_call.1} parent=1 // pred_check
      _
    $region15: #{tpu_custom_call.1} parent=1 // pred_check_branch
      %42 = sbr.rel (0) target = $region17
    $region16: #{tpu_custom_call.1} parent=1 // pred_region
      _
    $region17: #{tpu_custom_call.1} parent=1 // pred_fallthru
      _
    // Predicated region
    $region18: #{tpu_custom_call.1} parent=1 // pred_check
      _
    $region19: #{tpu_custom_call.1} parent=1 // pred_check_branch
      %44 = sbr.rel (0) target = $region21
    $region20: #{tpu_custom_call.1} parent=1 // pred_region
      %s46 = ssub.s32 8192, 8192
      %47 = vsyncadd [#allocation6], %s46
      %s48 = sshll.u32 [#allocation7], 4
      %s49 = int_to_ptr.vmem [resolvable:$true] %s48
      %54 = dma.hbm_to_vmem [thread:$0]  %s4, 8192, %s49, [#allocation6], 512, 512, 32
    $region21: #{tpu_custom_call.1} parent=1 // pred_fallthru
      _
    // Predicated region
    $region22: #{tpu_custom_call.1} parent=1 // pred_check
      _
    $region23: #{tpu_custom_call.1} parent=1 // pred_check_branch
      %56 = sbr.rel (0) target = $region25
    $region24: #{tpu_custom_call.1} parent=1 // pred_region
      _
    $region25: #{tpu_custom_call.1} parent=1 // pred_fallthru
      _
    // Predicated region
    $region26: #{tpu_custom_call.1} parent=1 // pred_check
      _
    $region27: #{tpu_custom_call.1} parent=1 // pred_check_branch
      %58 = sbr.rel (0) target = $region29
    $region28: #{tpu_custom_call.1} parent=1 // pred_region
      %s60 = ssub.s32 8192, 8192
      %61 = vsyncadd [#allocation9], %s60
      %s62 = sshll.u32 [#allocation8], 4
      %s63 = int_to_ptr.vmem [resolvable:$true] %s62
      %68 = dma.hbm_to_vmem [thread:$0]  %s6, 8192, %s63, [#allocation9], 128, 128, 8
    $region29: #{tpu_custom_call.1} parent=1 // pred_fallthru
      _
    // Predicated region
    $region30: #{tpu_custom_call.1} parent=1 // pred_check
      _
    $region31: #{tpu_custom_call.1} parent=1 // pred_check_branch
      %70 = sbr.rel (0) target = $region33
    $region32: #{tpu_custom_call.1} parent=1 // pred_region
      _
    $region33: #{tpu_custom_call.1} parent=1 // pred_fallthru
      _
    // Predicated region
    $region34: #{tpu_custom_call.1} parent=1 // pred_check
      _
    $region35: #{tpu_custom_call.1} parent=1 // pred_check_branch
      %72 = sbr.rel (0) target = $region37
    $region36: #{tpu_custom_call.1} parent=1 // pred_region
      %73 = dma.done [#allocation3], 64
    $region37: #{tpu_custom_call.1} parent=1 // pred_fallthru
      _
    // Predicated region
    $region38: #{tpu_custom_call.1} parent=1 // pred_check
      _
    $region39: #{tpu_custom_call.1} parent=1 // pred_check_branch
      %75 = sbr.rel (0) target = $region41
    $region40: #{tpu_custom_call.1} parent=1 // pred_region
      %76 = dma.done [#allocation6], 2048
    $region41: #{tpu_custom_call.1} parent=1 // pred_fallthru
      _
    // Predicated region
    $region42: #{tpu_custom_call.1} parent=1 // pred_check
      _
    $region43: #{tpu_custom_call.1} parent=1 // pred_check_branch
      %78 = sbr.rel (0) target = $region45
    $region44: #{tpu_custom_call.1} parent=1 // pred_region
      %79 = dma.done [#allocation6], 8192
    $region45: #{tpu_custom_call.1} parent=1 // pred_fallthru
      _
    // Predicated region
    $region46: #{tpu_custom_call.1} parent=1 // pred_check
      _
    $region47: #{tpu_custom_call.1} parent=1 // pred_check_branch
      %81 = sbr.rel (0) target = $region49
    $region48: #{tpu_custom_call.1} parent=1 // pred_region
      %82 = dma.done [#allocation9], 8192
    $region49: #{tpu_custom_call.1} parent=1 // pred_fallthru
      _
    %v83 = vld [vmem:[#allocation2] sm:$0xf]
    %v84 = vld [vmem:[#allocation5] sm:$0xff]
    %v85 = vld [vmem:[#allocation5 + $0x8] sm:$0xff]
    %v86 = vld [vmem:[#allocation5 + $0x10] sm:$0xff]
    %v87 = vld [vmem:[#allocation5 + $0x18] sm:$0xff]
    %v88 = vld [vmem:[#allocation5 + $0x20] sm:$0xff]
    %v89 = vld [vmem:[#allocation5 + $0x28] sm:$0xff]
    %v90 = vld [vmem:[#allocation5 + $0x30] sm:$0xff]
    %v91 = vld [vmem:[#allocation5 + $0x38] sm:$0xff]
    %v92 = vld [vmem:[#allocation5 + $0x40] sm:$0xff]
    %v93 = vld [vmem:[#allocation5 + $0x48] sm:$0xff]
    %v94 = vld [vmem:[#allocation5 + $0x50] sm:$0xff]
    %v95 = vld [vmem:[#allocation5 + $0x58] sm:$0xff]
    %v96 = vld [vmem:[#allocation5 + $0x60] sm:$0xff]
    %v97 = vld [vmem:[#allocation5 + $0x68] sm:$0xff]
    %v98 = vld [vmem:[#allocation5 + $0x70] sm:$0xff]
    %v99 = vld [vmem:[#allocation5 + $0x78] sm:$0xff]
    %100 = vmatprep.subr.mxu0 0.0
    %101 = vmatpush1.msra.mxu0 %v84
    %102 = vmatprep.subr.mxu0 0.0
    %103 = vmatpush1.msra.mxu0 %v85
    %104 = vmatprep.subr.mxu0 0.0
    %105 = vmatpush1.msra.mxu0 %v86
    %106 = vmatprep.subr.mxu0 0.0
    %107 = vmatpush1.msra.mxu0 %v87
    %108 = vmatprep.subr.mxu0 0.0
    %109 = vmatpush1.msra.mxu0 %v88
    %110 = vmatprep.subr.mxu0 0.0
    %111 = vmatpush1.msra.mxu0 %v89
    %112 = vmatprep.subr.mxu0 0.0
    %113 = vmatpush1.msra.mxu0 %v90
    %114 = vmatprep.subr.mxu0 0.0
    %115 = vmatpush1.msra.mxu0 %v91
    %116 = vmatprep.subr.mxu0 0.0
    %117 = vmatpush1.msra.mxu0 %v92
    %118 = vmatprep.subr.mxu0 0.0
    %119 = vmatpush1.msra.mxu0 %v93
    %120 = vmatprep.subr.mxu0 0.0
    %121 = vmatpush1.msra.mxu0 %v94
    %122 = vmatprep.subr.mxu0 0.0
    %123 = vmatpush1.msra.mxu0 %v95
    %124 = vmatprep.subr.mxu0 0.0
    %125 = vmatpush1.msra.mxu0 %v96
    %126 = vmatprep.subr.mxu0 0.0
    %127 = vmatpush1.msra.mxu0 %v97
    %128 = vmatprep.subr.mxu0 0.0
    %129 = vmatpush1.msra.mxu0 %v98
    %130 = vmatprep.subr.mxu0 0.0
    %131 = vmatpush1.msra.mxu0 %v99
    %132 = vmatprep.subr.mxu0 0.0
    %133 = vmatpush1.msra.mxu0 0.0
    %134 = vmatprep.subr.mxu0 0.0
    %135 = vmatpush1.msra.mxu0 0.0
    %136 = vmatprep.subr.mxu0 0.0
    %137 = vmatpush1.msra.mxu0 0.0
    %138 = vmatprep.subr.mxu0 0.0
    %139 = vmatpush1.msra.mxu0 0.0
    %140 = vmatprep.subr.mxu0 0.0
    %141 = vmatpush1.msra.mxu0 0.0
    %142 = vmatprep.subr.mxu0 0.0
    %143 = vmatpush1.msra.mxu0 0.0
    %144 = vmatprep.subr.mxu0 0.0
    %145 = vmatpush1.msra.mxu0 0.0
    %146 = vmatprep.subr.mxu0 0.0
    %147 = vmatpush1.msra.mxu0 0.0
    %148 = vmatprep.subr.mxu0 0.0
    %149 = vmatpush1.msra.mxu0 0.0
    %150 = vmatprep.subr.mxu0 0.0
    %151 = vmatpush1.msra.mxu0 0.0
    %152 = vmatprep.subr.mxu0 0.0
    %153 = vmatpush1.msra.mxu0 0.0
    %154 = vmatprep.subr.mxu0 0.0
    %155 = vmatpush1.msra.mxu0 0.0
    %156 = vmatprep.subr.mxu0 0.0
    %157 = vmatpush1.msra.mxu0 0.0
    %158 = vmatprep.subr.mxu0 0.0
    %159 = vmatpush1.msra.mxu0 0.0
    %160 = vmatprep.subr.mxu0 0.0
    %161 = vmatpush1.msra.mxu0 0.0
    %162 = vmatprep.subr.mxu0 0.0
    %163 = vmatpush1.msra.mxu0 0.0
    %164 = vmatprep.mubr.f32.mxu0 0.0
    %165 = vmatmul.mubr.f32.gmra.mrb[0].mxu0 %v83
    %v166 = vpop.f32.mrb[0].mxu0
    %v167 = vadd.f32 0.0, %v166
    %v168 = vpop.f32.mrb[0].mxu0
    %169 = vdwg.mxu0
    %v170 = vsub.f32 %v83, %v167
    %v171 = vmul.f32 %v170, %v170
    %172 = vmatprep.subr.mxu0 0.0
    %173 = vmatpush1.msra.mxu0 %v84
    %174 = vmatprep.subr.mxu0 0.0
    %175 = vmatpush1.msra.mxu0 %v85
    %176 = vmatprep.subr.mxu0 0.0
    %177 = vmatpush1.msra.mxu0 %v86
    %178 = vmatprep.subr.mxu0 0.0
    %179 = vmatpush1.msra.mxu0 %v87
    %180 = vmatprep.subr.mxu0 0.0
    %181 = vmatpush1.msra.mxu0 %v88
    %182 = vmatprep.subr.mxu0 0.0
    %183 = vmatpush1.msra.mxu0 %v89
    %184 = vmatprep.subr.mxu0 0.0
    %185 = vmatpush1.msra.mxu0 %v90
    %186 = vmatprep.subr.mxu0 0.0
    %187 = vmatpush1.msra.mxu0 %v91
    %188 = vmatprep.subr.mxu0 0.0
    %189 = vmatpush1.msra.mxu0 %v92
    %190 = vmatprep.subr.mxu0 0.0
    %191 = vmatpush1.msra.mxu0 %v93
    %192 = vmatprep.subr.mxu0 0.0
    %193 = vmatpush1.msra.mxu0 %v94
    %194 = vmatprep.subr.mxu0 0.0
    %195 = vmatpush1.msra.mxu0 %v95
    %196 = vmatprep.subr.mxu0 0.0
    %197 = vmatpush1.msra.mxu0 %v96
    %198 = vmatprep.subr.mxu0 0.0
    %199 = vmatpush1.msra.mxu0 %v97
    %200 = vmatprep.subr.mxu0 0.0
    %201 = vmatpush1.msra.mxu0 %v98
    %202 = vmatprep.subr.mxu0 0.0
    %203 = vmatpush1.msra.mxu0 %v99
    %204 = vmatprep.subr.mxu0 0.0
    %205 = vmatpush1.msra.mxu0 0.0
    %206 = vmatprep.subr.mxu0 0.0
    %207 = vmatpush1.msra.mxu0 0.0
    %208 = vmatprep.subr.mxu0 0.0
    %209 = vmatpush1.msra.mxu0 0.0
    %210 = vmatprep.subr.mxu0 0.0
    %211 = vmatpush1.msra.mxu0 0.0
    %212 = vmatprep.subr.mxu0 0.0
    %213 = vmatpush1.msra.mxu0 0.0
    %214 = vmatprep.subr.mxu0 0.0
    %215 = vmatpush1.msra.mxu0 0.0
    %216 = vmatprep.subr.mxu0 0.0
    %217 = vmatpush1.msra.mxu0 0.0
    %218 = vmatprep.subr.mxu0 0.0
    %219 = vmatpush1.msra.mxu0 0.0
    %220 = vmatprep.subr.mxu0 0.0
    %221 = vmatpush1.msra.mxu0 0.0
    %222 = vmatprep.subr.mxu0 0.0
    %223 = vmatpush1.msra.mxu0 0.0
    %224 = vmatprep.subr.mxu0 0.0
    %225 = vmatpush1.msra.mxu0 0.0
    %226 = vmatprep.subr.mxu0 0.0
    %227 = vmatpush1.msra.mxu0 0.0
    %228 = vmatprep.subr.mxu0 0.0
    %229 = vmatpush1.msra.mxu0 0.0
    %230 = vmatprep.subr.mxu0 0.0
    %231 = vmatpush1.msra.mxu0 0.0
    %232 = vmatprep.subr.mxu0 0.0
    %233 = vmatpush1.msra.mxu0 0.0
    %234 = vmatprep.subr.mxu0 0.0
    %235 = vmatpush1.msra.mxu0 0.0
    %236 = vmatprep.mubr.f32.mxu0 0.0
    %237 = vmatmul.mubr.f32.gmra.mrb[0].mxu0 %v171
    %v238 = vpop.f32.mrb[0].mxu0
    %v239 = vadd.f32 1e-05, %v238
    %v240 = vpop.f32.mrb[0].mxu0
    %241 = vdwg.mxu0
    %v242 = vrsqrt.pop %v239
    %v243 = vmul.f32 %v170, %v242
    %v244 = vld [vmem:[%s2] sm:$0x1]
    %v246 = vlaneseq
    %v247 = vshrl.u32 %v246, 7
    %v248 = vsub.s32 0, %v247
    %v249 = vrot.slane %v244, %v248
    %v251 = vmul.f32 %v243, %v249
    %v252 = vld [vmem:[%s3] sm:$0x1]
    %v254 = vlaneseq
    %v255 = vshrl.u32 %v254, 7
    %v256 = vsub.s32 0, %v255
    %v257 = vrot.slane %v252, %v256
    %v259 = vadd.f32 %v251, %v257
    %v260 = vld [vmem:[#allocation7] sm:$0xff]
    %v261 = vld [vmem:[#allocation7 + $0x8] sm:$0xff]
    %v262 = vld [vmem:[#allocation7 + $0x10] sm:$0xff]
    %v263 = vld [vmem:[#allocation7 + $0x18] sm:$0xff]
    %v264 = vld [vmem:[#allocation7 + $0x20] sm:$0xff]
    %v265 = vld [vmem:[#allocation7 + $0x28] sm:$0xff]
    %v266 = vld [vmem:[#allocation7 + $0x30] sm:$0xff]
    %v267 = vld [vmem:[#allocation7 + $0x38] sm:$0xff]
    %v268 = vld [vmem:[#allocation7 + $0x40] sm:$0xff]
    %v269 = vld [vmem:[#allocation7 + $0x48] sm:$0xff]
    %v270 = vld [vmem:[#allocation7 + $0x50] sm:$0xff]
    %v271 = vld [vmem:[#allocation7 + $0x58] sm:$0xff]
    %v272 = vld [vmem:[#allocation7 + $0x60] sm:$0xff]
    %v273 = vld [vmem:[#allocation7 + $0x68] sm:$0xff]
    %v274 = vld [vmem:[#allocation7 + $0x70] sm:$0xff]
    %v275 = vld [vmem:[#allocation7 + $0x78] sm:$0xff]
    %v276 = vld [vmem:[#allocation7 + $0x80] sm:$0xff]
    %v277 = vld [vmem:[#allocation7 + $0x88] sm:$0xff]
    %v278 = vld [vmem:[#allocation7 + $0x90] sm:$0xff]
    %v279 = vld [vmem:[#allocation7 + $0x98] sm:$0xff]
    %v280 = vld [vmem:[#allocation7 + $0xa0] sm:$0xff]
    %v281 = vld [vmem:[#allocation7 + $0xa8] sm:$0xff]
    %v282 = vld [vmem:[#allocation7 + $0xb0] sm:$0xff]
    %v283 = vld [vmem:[#allocation7 + $0xb8] sm:$0xff]
    %v284 = vld [vmem:[#allocation7 + $0xc0] sm:$0xff]
    %v285 = vld [vmem:[#allocation7 + $0xc8] sm:$0xff]
    %v286 = vld [vmem:[#allocation7 + $0xd0] sm:$0xff]
    %v287 = vld [vmem:[#allocation7 + $0xd8] sm:$0xff]
    %v288 = vld [vmem:[#allocation7 + $0xe0] sm:$0xff]
    %v289 = vld [vmem:[#allocation7 + $0xe8] sm:$0xff]
    %v290 = vld [vmem:[#allocation7 + $0xf0] sm:$0xff]
    %v291 = vld [vmem:[#allocation7 + $0xf8] sm:$0xff]
    %v292 = vld [vmem:[#allocation7 + $0x100] sm:$0xff]
    %v293 = vld [vmem:[#allocation7 + $0x108] sm:$0xff]
    %v294 = vld [vmem:[#allocation7 + $0x110] sm:$0xff]
    %v295 = vld [vmem:[#allocation7 + $0x118] sm:$0xff]
    %v296 = vld [vmem:[#allocation7 + $0x120] sm:$0xff]
    %v297 = vld [vmem:[#allocation7 + $0x128] sm:$0xff]
    %v298 = vld [vmem:[#allocation7 + $0x130] sm:$0xff]
    %v299 = vld [vmem:[#allocation7 + $0x138] sm:$0xff]
    %v300 = vld [vmem:[#allocation7 + $0x140] sm:$0xff]
    %v301 = vld [vmem:[#allocation7 + $0x148] sm:$0xff]
    %v302 = vld [vmem:[#allocation7 + $0x150] sm:$0xff]
    %v303 = vld [vmem:[#allocation7 + $0x158] sm:$0xff]
    %v304 = vld [vmem:[#allocation7 + $0x160] sm:$0xff]
    %v305 = vld [vmem:[#allocation7 + $0x168] sm:$0xff]
    %v306 = vld [vmem:[#allocation7 + $0x170] sm:$0xff]
    %v307 = vld [vmem:[#allocation7 + $0x178] sm:$0xff]
    %v308 = vld [vmem:[#allocation7 + $0x180] sm:$0xff]
    %v309 = vld [vmem:[#allocation7 + $0x188] sm:$0xff]
    %v310 = vld [vmem:[#allocation7 + $0x190] sm:$0xff]
    %v311 = vld [vmem:[#allocation7 + $0x198] sm:$0xff]
    %v312 = vld [vmem:[#allocation7 + $0x1a0] sm:$0xff]
    %v313 = vld [vmem:[#allocation7 + $0x1a8] sm:$0xff]
    %v314 = vld [vmem:[#allocation7 + $0x1b0] sm:$0xff]
    %v315 = vld [vmem:[#allocation7 + $0x1b8] sm:$0xff]
    %v316 = vld [vmem:[#allocation7 + $0x1c0] sm:$0xff]
    %v317 = vld [vmem:[#allocation7 + $0x1c8] sm:$0xff]
    %v318 = vld [vmem:[#allocation7 + $0x1d0] sm:$0xff]
    %v319 = vld [vmem:[#allocation7 + $0x1d8] sm:$0xff]
    %v320 = vld [vmem:[#allocation7 + $0x1e0] sm:$0xff]
    %v321 = vld [vmem:[#allocation7 + $0x1e8] sm:$0xff]
    %v322 = vld [vmem:[#allocation7 + $0x1f0] sm:$0xff]
    %v323 = vld [vmem:[#allocation7 + $0x1f8] sm:$0xff]
    %v324 = vld [vmem:[#allocation8] sm:$0xff]
    %v325 = vld [vmem:[#allocation8 + $0x8] sm:$0xff]
    %v326 = vld [vmem:[#allocation8 + $0x10] sm:$0xff]
    %v327 = vld [vmem:[#allocation8 + $0x18] sm:$0xff]
    %v328 = vld [vmem:[#allocation8 + $0x20] sm:$0xff]
    %v329 = vld [vmem:[#allocation8 + $0x28] sm:$0xff]
    %v330 = vld [vmem:[#allocation8 + $0x30] sm:$0xff]
    %v331 = vld [vmem:[#allocation8 + $0x38] sm:$0xff]
    %v332 = vld [vmem:[#allocation8 + $0x40] sm:$0xff]
    %v333 = vld [vmem:[#allocation8 + $0x48] sm:$0xff]
    %v334 = vld [vmem:[#allocation8 + $0x50] sm:$0xff]
    %v335 = vld [vmem:[#allocation8 + $0x58] sm:$0xff]
    %v336 = vld [vmem:[#allocation8 + $0x60] sm:$0xff]
    %v337 = vld [vmem:[#allocation8 + $0x68] sm:$0xff]
    %v338 = vld [vmem:[#allocation8 + $0x70] sm:$0xff]
    %v339 = vld [vmem:[#allocation8 + $0x78] sm:$0xff]
    %v340 = vld [vmem:[#allocation8 + $0x80] sm:$0xff]
    %v341 = vld [vmem:[#allocation8 + $0x88] sm:$0xff]
    %v342 = vld [vmem:[#allocation8 + $0x90] sm:$0xff]
    %v343 = vld [vmem:[#allocation8 + $0x98] sm:$0xff]
    %v344 = vld [vmem:[#allocation8 + $0xa0] sm:$0xff]
    %v345 = vld [vmem:[#allocation8 + $0xa8] sm:$0xff]
    %v346 = vld [vmem:[#allocation8 + $0xb0] sm:$0xff]
    %v347 = vld [vmem:[#allocation8 + $0xb8] sm:$0xff]
    %v348 = vld [vmem:[#allocation8 + $0xc0] sm:$0xff]
    %v349 = vld [vmem:[#allocation8 + $0xc8] sm:$0xff]
    %v350 = vld [vmem:[#allocation8 + $0xd0] sm:$0xff]
    %v351 = vld [vmem:[#allocation8 + $0xd8] sm:$0xff]
    %v352 = vld [vmem:[#allocation8 + $0xe0] sm:$0xff]
    %v353 = vld [vmem:[#allocation8 + $0xe8] sm:$0xff]
    %v354 = vld [vmem:[#allocation8 + $0xf0] sm:$0xff]
    %v355 = vld [vmem:[#allocation8 + $0xf8] sm:$0xff]
    %v356 = vld [vmem:[#allocation8 + $0x100] sm:$0xff]
    %v357 = vld [vmem:[#allocation8 + $0x108] sm:$0xff]
    %v358 = vld [vmem:[#allocation8 + $0x110] sm:$0xff]
    %v359 = vld [vmem:[#allocation8 + $0x118] sm:$0xff]
    %v360 = vld [vmem:[#allocation8 + $0x120] sm:$0xff]
    %v361 = vld [vmem:[#allocation8 + $0x128] sm:$0xff]
    %v362 = vld [vmem:[#allocation8 + $0x130] sm:$0xff]
    %v363 = vld [vmem:[#allocation8 + $0x138] sm:$0xff]
    %v364 = vld [vmem:[#allocation8 + $0x140] sm:$0xff]
    %v365 = vld [vmem:[#allocation8 + $0x148] sm:$0xff]
    %v366 = vld [vmem:[#allocation8 + $0x150] sm:$0xff]
    %v367 = vld [vmem:[#allocation8 + $0x158] sm:$0xff]
    %v368 = vld [vmem:[#allocation8 + $0x160] sm:$0xff]
    %v369 = vld [vmem:[#allocation8 + $0x168] sm:$0xff]
    %v370 = vld [vmem:[#allocation8 + $0x170] sm:$0xff]
    %v371 = vld [vmem:[#allocation8 + $0x178] sm:$0xff]
    %v372 = vld [vmem:[#allocation8 + $0x180] sm:$0xff]
    %v373 = vld [vmem:[#allocation8 + $0x188] sm:$0xff]
    %v374 = vld [vmem:[#allocation8 + $0x190] sm:$0xff]
    %v375 = vld [vmem:[#allocation8 + $0x198] sm:$0xff]
    %v376 = vld [vmem:[#allocation8 + $0x1a0] sm:$0xff]
    %v377 = vld [vmem:[#allocation8 + $0x1a8] sm:$0xff]
    %v378 = vld [vmem:[#allocation8 + $0x1b0] sm:$0xff]
    %v379 = vld [vmem:[#allocation8 + $0x1b8] sm:$0xff]
    %v380 = vld [vmem:[#allocation8 + $0x1c0] sm:$0xff]
    %v381 = vld [vmem:[#allocation8 + $0x1c8] sm:$0xff]
    %v382 = vld [vmem:[#allocation8 + $0x1d0] sm:$0xff]
    %v383 = vld [vmem:[#allocation8 + $0x1d8] sm:$0xff]
    %v384 = vld [vmem:[#allocation8 + $0x1e0] sm:$0xff]
    %v385 = vld [vmem:[#allocation8 + $0x1e8] sm:$0xff]
    %v386 = vld [vmem:[#allocation8 + $0x1f0] sm:$0xff]
    %v387 = vld [vmem:[#allocation8 + $0x1f8] sm:$0xff]
    %v388 = vld [vmem:[%s5] sm:$0xf]
    %v390 = vlaneseq
    %v391 = vshrl.u32 %v390, 7
    %v392 = vsub.s32 0, %v391
    %v393 = vrot.slane %v388, %v392
    %v394 = vlaneseq
    %v395 = vshrl.u32 %v394, 7
    %v396 = vsub.s32 1, %v395
    %v397 = vrot.slane %v388, %v396
    %v398 = vlaneseq
    %v399 = vshrl.u32 %v398, 7
    %v400 = vsub.s32 2, %v399
    %v401 = vrot.slane %v388, %v400
    %v402 = vlaneseq
    %v403 = vshrl.u32 %v402, 7
    %v404 = vsub.s32 3, %v403
    %v405 = vrot.slane %v388, %v404
    %410 = vmatprep.subr.mxu0 %v261
    %411 = vmatpush1.msra.mxu0 %v260
    %412 = vmatprep.subr.mxu0 %v265
    %413 = vmatpush1.msra.mxu0 %v264
    %414 = vmatprep.subr.mxu0 %v269
    %415 = vmatpush1.msra.mxu0 %v268
    %416 = vmatprep.subr.mxu0 %v273
    %417 = vmatpush1.msra.mxu0 %v272
    %418 = vmatprep.subr.mxu0 %v277
    %419 = vmatpush1.msra.mxu0 %v276
    %420 = vmatprep.subr.mxu0 %v281
    %421 = vmatpush1.msra.mxu0 %v280
    %422 = vmatprep.subr.mxu0 %v285
    %423 = vmatpush1.msra.mxu0 %v284
    %424 = vmatprep.subr.mxu0 %v289
    %425 = vmatpush1.msra.mxu0 %v288
    %426 = vmatprep.subr.mxu0 %v293
    %427 = vmatpush1.msra.mxu0 %v292
    %428 = vmatprep.subr.mxu0 %v297
    %429 = vmatpush1.msra.mxu0 %v296
    %430 = vmatprep.subr.mxu0 %v301
    %431 = vmatpush1.msra.mxu0 %v300
    %432 = vmatprep.subr.mxu0 %v305
    %433 = vmatpush1.msra.mxu0 %v304
    %434 = vmatprep.subr.mxu0 %v309
    %435 = vmatpush1.msra.mxu0 %v308
    %436 = vmatprep.subr.mxu0 %v313
    %437 = vmatpush1.msra.mxu0 %v312
    %438 = vmatprep.subr.mxu0 %v317
    %439 = vmatpush1.msra.mxu0 %v316
    %440 = vmatprep.subr.mxu0 %v321
    %441 = vmatpush1.msra.mxu0 %v320
    %442 = vmatprep.subr.mxu0 0.0
    %443 = vmatpush1.msra.mxu0 0.0
    %444 = vmatprep.subr.mxu0 0.0
    %445 = vmatpush1.msra.mxu0 0.0
    %446 = vmatprep.subr.mxu0 0.0
    %447 = vmatpush1.msra.mxu0 0.0
    %448 = vmatprep.subr.mxu0 0.0
    %449 = vmatpush1.msra.mxu0 0.0
    %450 = vmatprep.subr.mxu0 0.0
    %451 = vmatpush1.msra.mxu0 0.0
    %452 = vmatprep.subr.mxu0 0.0
    %453 = vmatpush1.msra.mxu0 0.0
    %454 = vmatprep.subr.mxu0 0.0
    %455 = vmatpush1.msra.mxu0 0.0
    %456 = vmatprep.subr.mxu0 0.0
    %457 = vmatpush1.msra.mxu0 0.0
    %458 = vmatprep.subr.mxu0 0.0
    %459 = vmatpush1.msra.mxu0 0.0
    %460 = vmatprep.subr.mxu0 0.0
    %461 = vmatpush1.msra.mxu0 0.0
    %462 = vmatprep.subr.mxu0 0.0
    %463 = vmatpush1.msra.mxu0 0.0
    %464 = vmatprep.subr.mxu0 0.0
    %465 = vmatpush1.msra.mxu0 0.0
    %466 = vmatprep.subr.mxu0 0.0
    %467 = vmatpush1.msra.mxu0 0.0
    %468 = vmatprep.subr.mxu0 0.0
    %469 = vmatpush1.msra.mxu0 0.0
    %470 = vmatprep.subr.mxu0 0.0
    %471 = vmatpush1.msra.mxu0 0.0
    %472 = vmatprep.subr.mxu0 0.0
    %473 = vmatpush1.msra.mxu0 0.0
    %474 = vmatprep.mubr.f32.mxu0 0.0
    %475 = vmatmul.mubr.f32.gmra.mrb[0].mxu0 %v259
    %v476 = vpop.f32.mrb[0].mxu0
    %v477 = vadd.f32 %v393, %v476
    %v478 = vpop.f32.mrb[0].mxu0
    %v479 = vadd.f32 %v397, %v478
    %480 = vdwg.mxu0
    %481 = vmatprep.subr.mxu0 %v263
    %482 = vmatpush1.msra.mxu0 %v262
    %483 = vmatprep.subr.mxu0 %v267
    %484 = vmatpush1.msra.mxu0 %v266
    %485 = vmatprep.subr.mxu0 %v271
    %486 = vmatpush1.msra.mxu0 %v270
    %487 = vmatprep.subr.mxu0 %v275
    %488 = vmatpush1.msra.mxu0 %v274
    %489 = vmatprep.subr.mxu0 %v279
    %490 = vmatpush1.msra.mxu0 %v278
    %491 = vmatprep.subr.mxu0 %v283
    %492 = vmatpush1.msra.mxu0 %v282
    %493 = vmatprep.subr.mxu0 %v287
    %494 = vmatpush1.msra.mxu0 %v286
    %495 = vmatprep.subr.mxu0 %v291
    %496 = vmatpush1.msra.mxu0 %v290
    %497 = vmatprep.subr.mxu0 %v295
    %498 = vmatpush1.msra.mxu0 %v294
    %499 = vmatprep.subr.mxu0 %v299
    %500 = vmatpush1.msra.mxu0 %v298
    %501 = vmatprep.subr.mxu0 %v303
    %502 = vmatpush1.msra.mxu0 %v302
    %503 = vmatprep.subr.mxu0 %v307
    %504 = vmatpush1.msra.mxu0 %v306
    %505 = vmatprep.subr.mxu0 %v311
    %506 = vmatpush1.msra.mxu0 %v310
    %507 = vmatprep.subr.mxu0 %v315
    %508 = vmatpush1.msra.mxu0 %v314
    %509 = vmatprep.subr.mxu0 %v319
    %510 = vmatpush1.msra.mxu0 %v318
    %511 = vmatprep.subr.mxu0 %v323
    %512 = vmatpush1.msra.mxu0 %v322
    %513 = vmatprep.subr.mxu0 0.0
    %514 = vmatpush1.msra.mxu0 0.0
    %515 = vmatprep.subr.mxu0 0.0
    %516 = vmatpush1.msra.mxu0 0.0
    %517 = vmatprep.subr.mxu0 0.0
    %518 = vmatpush1.msra.mxu0 0.0
    %519 = vmatprep.subr.mxu0 0.0
    %520 = vmatpush1.msra.mxu0 0.0
    %521 = vmatprep.subr.mxu0 0.0
    %522 = vmatpush1.msra.mxu0 0.0
    %523 = vmatprep.subr.mxu0 0.0
    %524 = vmatpush1.msra.mxu0 0.0
    %525 = vmatprep.subr.mxu0 0.0
    %526 = vmatpush1.msra.mxu0 0.0
    %527 = vmatprep.subr.mxu0 0.0
    %528 = vmatpush1.msra.mxu0 0.0
    %529 = vmatprep.subr.mxu0 0.0
    %530 = vmatpush1.msra.mxu0 0.0
    %531 = vmatprep.subr.mxu0 0.0
    %532 = vmatpush1.msra.mxu0 0.0
    %533 = vmatprep.subr.mxu0 0.0
    %534 = vmatpush1.msra.mxu0 0.0
    %535 = vmatprep.subr.mxu0 0.0
    %536 = vmatpush1.msra.mxu0 0.0
    %537 = vmatprep.subr.mxu0 0.0
    %538 = vmatpush1.msra.mxu0 0.0
    %539 = vmatprep.subr.mxu0 0.0
    %540 = vmatpush1.msra.mxu0 0.0
    %541 = vmatprep.subr.mxu0 0.0
    %542 = vmatpush1.msra.mxu0 0.0
    %543 = vmatprep.subr.mxu0 0.0
    %544 = vmatpush1.msra.mxu0 0.0
    %545 = vmatprep.mubr.f32.mxu0 0.0
    %546 = vmatmul.mubr.f32.gmra.mrb[0].mxu0 %v259
    %v547 = vpop.f32.mrb[0].mxu0
    %v548 = vadd.f32 %v401, %v547
    %v549 = vpop.f32.mrb[0].mxu0
    %v550 = vadd.f32 %v405, %v549
    %551 = vdwg.mxu0
    %v552 = vmul.f32 %v477, 0.5
    %v553 = vmul.f32 %v479, 0.5
    %v554 = vmul.f32 %v548, 0.5
    %v555 = vmul.f32 %v550, 0.5
    %v556 = vmul.f32 %v477, 0.044715
    %v557 = vmul.f32 %v479, 0.044715
    %v558 = vmul.f32 %v548, 0.044715
    %v559 = vmul.f32 %v550, 0.044715
    %v560 = vmul.f32 %v556, %v477
    %v561 = vmul.f32 %v557, %v479
    %v562 = vmul.f32 %v558, %v548
    %v563 = vmul.f32 %v559, %v550
    %v564 = vmul.f32 %v560, %v477
    %v565 = vmul.f32 %v561, %v479
    %v566 = vmul.f32 %v562, %v548
    %v567 = vmul.f32 %v563, %v550
    %v568 = vadd.f32 %v477, %v564
    %v569 = vadd.f32 %v479, %v565
    %v570 = vadd.f32 %v548, %v566
    %v571 = vadd.f32 %v550, %v567
    %v572 = vmul.f32 %v568, 0.7978846
    %v573 = vmul.f32 %v569, 0.7978846
    %v574 = vmul.f32 %v570, 0.7978846
    %v575 = vmul.f32 %v571, 0.7978846
    %v576 = vtanh.pop %v572
    %v577 = vtanh.pop %v573
    %v578 = vtanh.pop %v574
    %v579 = vtanh.pop %v575
    %v580 = vadd.f32 %v576, 1.0
    %v581 = vadd.f32 %v577, 1.0
    %v582 = vadd.f32 %v578, 1.0
    %v583 = vadd.f32 %v579, 1.0
    %v584 = vmul.f32 %v552, %v580
    %v585 = vmul.f32 %v553, %v581
    %v586 = vmul.f32 %v554, %v582
    %v587 = vmul.f32 %v555, %v583
    %v588 = vld [vmem:[%s7] sm:$0x1]
    %v590 = vlaneseq
    %v591 = vshrl.u32 %v590, 7
    %v592 = vsub.s32 0, %v591
    %v593 = vrot.slane %v588, %v592
    %595 = vmatprep.subr.mxu0 0.0
    %596 = vmatpush1.msra.mxu0 %v324
    %597 = vmatprep.subr.mxu0 0.0
    %598 = vmatpush1.msra.mxu0 %v325
    %599 = vmatprep.subr.mxu0 0.0
    %600 = vmatpush1.msra.mxu0 %v326
    %601 = vmatprep.subr.mxu0 0.0
    %602 = vmatpush1.msra.mxu0 %v327
    %603 = vmatprep.subr.mxu0 0.0
    %604 = vmatpush1.msra.mxu0 %v328
    %605 = vmatprep.subr.mxu0 0.0
    %606 = vmatpush1.msra.mxu0 %v329
    %607 = vmatprep.subr.mxu0 0.0
    %608 = vmatpush1.msra.mxu0 %v330
    %609 = vmatprep.subr.mxu0 0.0
    %610 = vmatpush1.msra.mxu0 %v331
    %611 = vmatprep.subr.mxu0 0.0
    %612 = vmatpush1.msra.mxu0 %v332
    %613 = vmatprep.subr.mxu0 0.0
    %614 = vmatpush1.msra.mxu0 %v333
    %615 = vmatprep.subr.mxu0 0.0
    %616 = vmatpush1.msra.mxu0 %v334
    %617 = vmatprep.subr.mxu0 0.0
    %618 = vmatpush1.msra.mxu0 %v335
    %619 = vmatprep.subr.mxu0 0.0
    %620 = vmatpush1.msra.mxu0 %v336
    %621 = vmatprep.subr.mxu0 0.0
    %622 = vmatpush1.msra.mxu0 %v337
    %623 = vmatprep.subr.mxu0 0.0
    %624 = vmatpush1.msra.mxu0 %v338
    %625 = vmatprep.subr.mxu0 0.0
    %626 = vmatpush1.msra.mxu0 %v339
    %627 = vmatprep.subr.mxu0 0.0
    %628 = vmatpush1.msra.mxu0 %v340
    %629 = vmatprep.subr.mxu0 0.0
    %630 = vmatpush1.msra.mxu0 %v341
    %631 = vmatprep.subr.mxu0 0.0
    %632 = vmatpush1.msra.mxu0 %v342
    %633 = vmatprep.subr.mxu0 0.0
    %634 = vmatpush1.msra.mxu0 %v343
    %635 = vmatprep.subr.mxu0 0.0
    %636 = vmatpush1.msra.mxu0 %v344
    %637 = vmatprep.subr.mxu0 0.0
    %638 = vmatpush1.msra.mxu0 %v345
    %639 = vmatprep.subr.mxu0 0.0
    %640 = vmatpush1.msra.mxu0 %v346
    %641 = vmatprep.subr.mxu0 0.0
    %642 = vmatpush1.msra.mxu0 %v347
    %643 = vmatprep.subr.mxu0 0.0
    %644 = vmatpush1.msra.mxu0 %v348
    %645 = vmatprep.subr.mxu0 0.0
    %646 = vmatpush1.msra.mxu0 %v349
    %647 = vmatprep.subr.mxu0 0.0
    %648 = vmatpush1.msra.mxu0 %v350
    %649 = vmatprep.subr.mxu0 0.0
    %650 = vmatpush1.msra.mxu0 %v351
    %651 = vmatprep.subr.mxu0 0.0
    %652 = vmatpush1.msra.mxu0 %v352
    %653 = vmatprep.subr.mxu0 0.0
    %654 = vmatpush1.msra.mxu0 %v353
    %655 = vmatprep.subr.mxu0 0.0
    %656 = vmatpush1.msra.mxu0 %v354
    %657 = vmatprep.subr.mxu0 0.0
    %658 = vmatpush1.msra.mxu0 %v355
    %659 = vmatprep.mubr.f32.mxu0 %v585
    %660 = vmatmul.mubr.f32.gmra.mrb[0].mxu0 %v584
    %v661 = vpop.f32.mrb[0].mxu0
    %v662 = vadd.f32 %v593, %v661
    %v663 = vpop.f32.mrb[0].mxu0
    %664 = vdwg.mxu0
    %665 = vmatprep.subr.mxu0 0.0
    %666 = vmatpush1.msra.mxu0 %v356
    %667 = vmatprep.subr.mxu0 0.0
    %668 = vmatpush1.msra.mxu0 %v357
    %669 = vmatprep.subr.mxu0 0.0
    %670 = vmatpush1.msra.mxu0 %v358
    %671 = vmatprep.subr.mxu0 0.0
    %672 = vmatpush1.msra.mxu0 %v359
    %673 = vmatprep.subr.mxu0 0.0
    %674 = vmatpush1.msra.mxu0 %v360
    %675 = vmatprep.subr.mxu0 0.0
    %676 = vmatpush1.msra.mxu0 %v361
    %677 = vmatprep.subr.mxu0 0.0
    %678 = vmatpush1.msra.mxu0 %v362
    %679 = vmatprep.subr.mxu0 0.0
    %680 = vmatpush1.msra.mxu0 %v363
    %681 = vmatprep.subr.mxu0 0.0
    %682 = vmatpush1.msra.mxu0 %v364
    %683 = vmatprep.subr.mxu0 0.0
    %684 = vmatpush1.msra.mxu0 %v365
    %685 = vmatprep.subr.mxu0 0.0
    %686 = vmatpush1.msra.mxu0 %v366
    %687 = vmatprep.subr.mxu0 0.0
    %688 = vmatpush1.msra.mxu0 %v367
    %689 = vmatprep.subr.mxu0 0.0
    %690 = vmatpush1.msra.mxu0 %v368
    %691 = vmatprep.subr.mxu0 0.0
    %692 = vmatpush1.msra.mxu0 %v369
    %693 = vmatprep.subr.mxu0 0.0
    %694 = vmatpush1.msra.mxu0 %v370
    %695 = vmatprep.subr.mxu0 0.0
    %696 = vmatpush1.msra.mxu0 %v371
    %697 = vmatprep.subr.mxu0 0.0
    %698 = vmatpush1.msra.mxu0 %v372
    %699 = vmatprep.subr.mxu0 0.0
    %700 = vmatpush1.msra.mxu0 %v373
    %701 = vmatprep.subr.mxu0 0.0
    %702 = vmatpush1.msra.mxu0 %v374
    %703 = vmatprep.subr.mxu0 0.0
    %704 = vmatpush1.msra.mxu0 %v375
    %705 = vmatprep.subr.mxu0 0.0
    %706 = vmatpush1.msra.mxu0 %v376
    %707 = vmatprep.subr.mxu0 0.0
    %708 = vmatpush1.msra.mxu0 %v377
    %709 = vmatprep.subr.mxu0 0.0
    %710 = vmatpush1.msra.mxu0 %v378
    %711 = vmatprep.subr.mxu0 0.0
    %712 = vmatpush1.msra.mxu0 %v379
    %713 = vmatprep.subr.mxu0 0.0
    %714 = vmatpush1.msra.mxu0 %v380
    %715 = vmatprep.subr.mxu0 0.0
    %716 = vmatpush1.msra.mxu0 %v381
    %717 = vmatprep.subr.mxu0 0.0
    %718 = vmatpush1.msra.mxu0 %v382
    %719 = vmatprep.subr.mxu0 0.0
    %720 = vmatpush1.msra.mxu0 %v383
    %721 = vmatprep.subr.mxu0 0.0
    %722 = vmatpush1.msra.mxu0 %v384
    %723 = vmatprep.subr.mxu0 0.0
    %724 = vmatpush1.msra.mxu0 %v385
    %725 = vmatprep.subr.mxu0 0.0
    %726 = vmatpush1.msra.mxu0 %v386
    %727 = vmatprep.subr.mxu0 0.0
    %728 = vmatpush1.msra.mxu0 %v387
    %729 = vmatprep.mubr.f32.mxu0 %v587
    %730 = vmatmul.mubr.f32.gmra.mrb[0].mxu0 %v586
    %v731 = vpop.f32.mrb[0].mxu0
    %v732 = vadd.f32 %v662, %v731
    %v733 = vpop.f32.mrb[0].mxu0
    %734 = vdwg.mxu0
    %v735 = vadd.f32 %v83, %v732
    %736 = vst [vmem:[#allocation10] sm:$0xf] %v735
    // Predicated region
    $region50: #{tpu_custom_call.1} parent=1 // pred_check
      _
    $region51: #{tpu_custom_call.1} parent=1 // pred_check_branch
      %738 = sbr.rel (0) target = $region53
    $region52: #{tpu_custom_call.1} parent=1 // pred_region
      %s740 = ssub.s32 64, 64
      %741 = vsyncadd [#allocation4], %s740
      %s743 = sshll.u32 [#allocation10], 4
      %s744 = int_to_ptr.vmem [resolvable:$true] %s743
      %746 = dma.vmem_to_hbm [thread:$0]  %s744, 64, %s8, [#allocation4]
    $region53: #{tpu_custom_call.1} parent=1 // pred_fallthru
      _
    // Predicated region
    $region54: #{tpu_custom_call.1} parent=1 // pred_check
      _
    $region55: #{tpu_custom_call.1} parent=1 // pred_check_branch
      %748 = sbr.rel (0) target = $region57
    $region56: #{tpu_custom_call.1} parent=1 // pred_region
      %749 = dma.done [#allocation4], 64
    $region57: #{tpu_custom_call.1} parent=1 // pred_fallthru
      _
    %750 = vsyncpa [#allocation3], 1
    %751 = vsyncpa [#allocation6], 1
    %752 = vsyncpa [#allocation9], 1
    %753 = vsyncpa [#allocation4], 1

</llo_original>
